<compile_context>
chip_gen: v7x
topology: tpu7x:2x2x1
jax: 0.10.0
libtpu: 0.0.40
codegen_flags: <defaults>
</compile_context>

<pallas_src>
import math

import numpy as np
import jax
import jax.numpy as jnp
from jax import lax
from jax.experimental import pallas as pl
from jax.experimental.pallas import tpu as pltpu


def _pe2d_kernel(tab_ref, out_ref, pat_ref):
    """tab: (2, W*D) [row 0 = hfreq, row 1 = wterm]; out: (1, TH, W*D);
    pat: (TH, W*D) VMEM scratch (pattern cache, reused across the batch axis).

    out[h, w*D + c] = sin(h * hfreq[w*D+c] + wterm[w*D+c])
      hfreq = freq[c]              for height channels, 0 otherwise
      wterm = w*freq[c] + phase[c] for width  channels, phase[c] otherwise
      phase[c] = pi/2 on odd c turns sin into cos.
    """
    # All pallas index primitives at top level (NOT inside pl.when bodies).
    ht = pl.program_id(0)
    b = pl.program_id(1)
    TH, WD = pat_ref.shape
    h0 = ht * TH                     # scalar closed over by the branch below
    tab = tab_ref[...]               # (2, WD) VMEM load, negligible
    hfreq = tab[0:1, :]              # (1, WD)
    wterm = tab[1:2, :]              # (1, WD)

    @pl.when(b == 0)
    def _():
        # Build the (TH, WD) pattern once per H tile; for a partial last tile
        # the extra rows are masked on store, so out-of-range h is harmless.
        h = (lax.broadcasted_iota(jnp.int32, (TH, WD), 0) + h0).astype(jnp.float32)
        pat_ref[...] = jnp.sin(h * hfreq + wterm)

    # Batch replication = pure VMEM->HBM store of the cached pattern.
    out_ref[0] = pat_ref[...]


def pe2d(x, res, dim):
    """Pallas implementation of PE2D.forward(x, res) -> (B, H*W, dim) float32."""
    B = x.shape[0]
    H, W = res
    channels = int(math.ceil(dim / 4) * 2)
    WD = W * dim

    # --- glue (parameter setup, not the hot path): one flat (2, W*dim) table ---
    inv_freq = 1.0 / (
        10000.0 ** (jnp.arange(0, channels, 2, dtype=jnp.float32) / channels)
    )
    c = jnp.arange(dim)
    c_mod = jnp.where(c < channels, c, c - channels)
    freq_c = inv_freq[c_mod // 2].astype(jnp.float32)            # (dim,)
    phase_c = jnp.where(c % 2 == 0, 0.0, jnp.pi / 2).astype(jnp.float32)
    is_h = c < channels                                          # height vs width half

    hfreq_flat = jnp.tile(jnp.where(is_h, freq_c, 0.0), W)       # (WD,)
    w_pos = jnp.repeat(jnp.arange(W, dtype=jnp.float32), dim)
    wterm_flat = (
        w_pos * jnp.tile(jnp.where(is_h, 0.0, freq_c), W) + jnp.tile(phase_c, W)
    ).astype(jnp.float32)                                        # (WD,)
    table = jnp.stack([hfreq_flat, wterm_flat], axis=0)          # (2, WD)

    # --- tile height: ~8 MiB output tiles (store-bound; amortizes grid-step
    #     overhead), TH a multiple of 8 or equal to full H ---
    row_bytes = WD * 4
    target_bytes = 8 * 1024 * 1024
    TH = max(8, (target_bytes // max(row_bytes, 1)) // 8 * 8)
    # Keep >= 2 H tiles whenever H allows: the H axis is the only "parallel"
    # axis, so this feeds both v7x TensorCores and hides the b==0 sin build.
    if H > 8:
        half_up8 = -(-((H + 1) // 2) // 8) * 8
        TH = min(TH, half_up8)
    if TH >= H:
        TH = H                       # full-extent block is always a legal shape
    num_h = pl.cdiv(H, TH)           # last tile may be partial (masked stores)

    tile_bytes = TH * WD * 4
    # out double buffer (2x tile) + pattern scratch (1x tile) + headroom,
    # capped at v7x's 64 MiB physical VMEM per core.
    vmem_limit = int(min(64 * 1024 * 1024,
                         max(16 * 1024 * 1024, 3 * tile_bytes + (8 << 20))))
    # (For extreme W*dim where even TH=8 overshoots VMEM, a lane-axis split of
    #  WD would be needed; not required for typical PE2D shapes.)

    out = pl.pallas_call(
        _pe2d_kernel,
        out_shape=jax.ShapeDtypeStruct((B, H, WD), jnp.float32),
        grid=(num_h, B),
        in_specs=[
            pl.BlockSpec((2, WD), lambda ht, b: (0, 0)),
        ],
        out_specs=pl.BlockSpec((1, TH, WD), lambda ht, b: (b, ht, 0)),
        scratch_shapes=[pltpu.VMEM((TH, WD), jnp.float32)],
        compiler_params=pltpu.CompilerParams(
            dimension_semantics=("parallel", "arbitrary"),
            vmem_limit_bytes=vmem_limit,
        ),
    )(table)

    # Free reshape: flat (h, w*dim) layout is exactly 'b h w d -> b (h w) d'.
    return out.reshape(B, H * W, dim)


def _reference_pe2d(B, H, W, dim):
    """NumPy port of PositionalEncoding2D + rearrange, for correctness check."""
    channels = int(np.ceil(dim / 4) * 2)
    inv_freq = 1.0 / (
        10000.0 ** (np.arange(0, channels, 2, dtype=np.float32) / channels)
    )
    pos_x = np.arange(H, dtype=np.float32)
    pos_y = np.arange(W, dtype=np.float32)
    sin_x = np.einsum("i,j->ij", pos_x, inv_freq)
    sin_y = np.einsum("i,j->ij", pos_y, inv_freq)

    def get_emb(s):
        return np.stack([np.sin(s), np.cos(s)], axis=-1).reshape(s.shape[0], -1)

    emb = np.zeros((H, W, channels * 2), dtype=np.float32)
    emb[:, :, :channels] = get_emb(sin_x)[:, None, :]
    emb[:, :, channels : 2 * channels] = get_emb(sin_y)[None, :, :]
    pe = np.broadcast_to(emb[None, :, :, :dim], (B, H, W, dim))
    return np.ascontiguousarray(pe).reshape(B, H * W, dim)


if __name__ == "__main__":
    # x is NCHW; only its batch dim matters for the forward.
    B, C, Hx, Wx = 2, 4, 16, 16
    dim = 32
    res = (16, 16)

    key = jax.random.PRNGKey(0)
    x = jax.random.normal(key, (B, C, Hx, Wx), dtype=jnp.float32)

    out = jax.block_until_ready(pe2d(x, res, dim))
    ref = _reference_pe2d(B, res[0], res[1], dim)
    np.testing.assert_allclose(np.asarray(out), ref, rtol=1e-5, atol=1e-5)

    # Extra check: dim not a multiple of 4 (exercises channel slicing path).
    out2 = jax.block_until_ready(pe2d(x[:1], (8, 8), 6))
    ref2 = _reference_pe2d(1, 8, 8, 6)
    np.testing.assert_allclose(np.asarray(out2), ref2, rtol=1e-5, atol=1e-5)

    print("KERNEL_OK")
</pallas_src>

<mosaic_0001>
module attributes {stable_mosaic.version = 11 : i64} {
  func.func @_pe2d_kernel(%arg0: i32, %arg1: i32, %arg2: memref<2x512xf32, #tpu.memory_space<vmem>>, %arg3: memref<1x8x512xf32, #tpu.memory_space<vmem>>, %arg4: memref<8x512xf32, #tpu.memory_space<vmem>>) attributes {dimension_semantics = [#tpu.dimension_semantics<parallel>, #tpu.dimension_semantics<arbitrary>], iteration_bounds = array<i64: 2, 2>, scalar_prefetch = 0 : i64, scratch_operands = 1 : i64, tpu.core_type = #tpu.core_type<tc>, window_params = [{pipeline_mode = #tpu.pipeline_mode<synchronous>, transform_indices = @transform_0, window_bounds = array<i64: 2, 512>}, {transform_indices = @transform_1, window_bounds = array<i64: 1, 8, 512>}]} {
    %c8_i32 = arith.constant 8 : i32
    %0 = arith.muli %arg0, %c8_i32 : i32
    %c0 = arith.constant 0 : index
    %c0_0 = arith.constant 0 : index
    %1 = vector.load %arg2[%c0, %c0_0] : memref<2x512xf32, #tpu.memory_space<vmem>>, vector<2x512xf32>
    %2 = vector.extract_strided_slice %1 {offsets = [0, 0], sizes = [1, 512], strides = [1, 1]} : vector<2x512xf32> to vector<1x512xf32>
    %3 = vector.extract_strided_slice %1 {offsets = [1, 0], sizes = [1, 512], strides = [1, 1]} : vector<2x512xf32> to vector<1x512xf32>
    %c0_i32 = arith.constant 0 : i32
    %4 = arith.cmpi eq, %arg1, %c0_i32 : i32
    %5 = arith.extui %4 : i1 to i32
    %c0_i32_1 = arith.constant 0 : i32
    %6 = arith.cmpi ne, %5, %c0_i32_1 : i32
    scf.if %6 {
      %11 = tpu.iota {dimensions = array<i32: 0>} : vector<8x512xi32>
      %12 = vector.broadcast %0 : i32 to vector<8x512xi32>
      %13 = arith.addi %11, %12 : vector<8x512xi32>
      %14 = arith.sitofp %13 : vector<8x512xi32> to vector<8x512xf32>
      %15 = vector.broadcast %2 : vector<1x512xf32> to vector<8x512xf32>
      %16 = arith.mulf %14, %15 : vector<8x512xf32>
      %17 = vector.broadcast %3 : vector<1x512xf32> to vector<8x512xf32>
      %18 = arith.addf %16, %17 : vector<8x512xf32>
      %19 = math.sin %18 : vector<8x512xf32>
      %c0_7 = arith.constant 0 : index
      %c0_8 = arith.constant 0 : index
      %20 = vector.load %arg4[%c0_7, %c0_8] : memref<8x512xf32, #tpu.memory_space<vmem>>, vector<8x512xf32>
      tpu.vector_store %arg4[%c0_7, %c0_8], %19 {strides = array<i32>} : memref<8x512xf32, #tpu.memory_space<vmem>>, vector<8x512xf32>,
    } else {
    }
    %c0_2 = arith.constant 0 : index
    %c0_3 = arith.constant 0 : index
    %7 = vector.load %arg4[%c0_2, %c0_3] : memref<8x512xf32, #tpu.memory_space<vmem>>, vector<8x512xf32>
    %c0_4 = arith.constant 0 : index
    %c0_5 = arith.constant 0 : index
    %c0_6 = arith.constant 0 : index
    %8 = vector.load %arg3[%c0_4, %c0_5, %c0_6] : memref<1x8x512xf32, #tpu.memory_space<vmem>>, vector<1x8x512xf32>
    %9 = vector.shape_cast %8 : vector<1x8x512xf32> to vector<8x512xf32>
    %10 = vector.shape_cast %7 : vector<8x512xf32> to vector<1x8x512xf32>
    tpu.vector_store %arg3[%c0_4, %c0_5, %c0_6], %10 {strides = array<i32>} : memref<1x8x512xf32, #tpu.memory_space<vmem>>, vector<1x8x512xf32>,
    return
  }
  func.func @transform_0(%arg0: i32, %arg1: i32) -> (i32, i32) {
    %c0_i32 = arith.constant 0 : i32
    %c0_i32_0 = arith.constant 0 : i32
    %c0_i32_1 = arith.constant 0 : i32
    return %c0_i32, %c0_i32_0 : i32, i32
  }
  func.func @transform_1(%arg0: i32, %arg1: i32) -> (i32, i32, i32) {
    %c0_i32 = arith.constant 0 : i32
    %c0_i32_0 = arith.constant 0 : i32
    return %arg1, %arg0, %c0_i32 : i32, i32, i32
  }
}

</mosaic_0001>

<llo_original>
// kernel: tpu_custom_call.1
$region0: #{tpu_custom_call.1}
  #allocation0 [shape = 'u32[]', space=smem, size = 0x4, offset = 0x4, fixed_abs, tag = 'smem constant byte address 0x4 - core index']
  #allocation1 [shape = 'u32[144,128]{1,0:T(1,128)}', space=vmem, size = 0x12000, scoped, tag = 'internal scratch']
  #allocation2 [shape = 'f32[8,512]{1,0:T(8,128)}', space=vmem, size = 0x4000, scoped, tag = 'scratch operand']
  %s0 = inlined_call_operand.hbm [shape: f32[2,512], index: 0, kind: input, shape index: {}]
  %s1 = inlined_call_operand.hbm [shape: f32[2,16,512], index: 1, kind: output, shape index: {}]
  %s2 = sld [smem:[#allocation0]]
  $region45: #{tpu_custom_call.1} parent=0
    _
  %s4 = ssub.s32 1, %s2
  %s5 = scalar_select 0, %s4, %s2
  $region1: #{tpu_custom_call.1} parent=0
    #allocation3 [shape = 'u8[4096]{0}', space=vmem, size = 0x1000, scoped, tag = 'input window, operand 0, single buffered']
    #allocation4 [shape = 's32[2]{0}', space=sflag, size = 0x8, scoped, tag = 'scoped memory for tpu_custom_call.1']
    #allocation5 [shape = 's32[2]{0}', space=sflag, size = 0x8, scoped, tag = 'scoped memory for tpu_custom_call.1']
    #allocation6 [shape = 'u8[32768]{0}', space=vmem, size = 0x8000, scoped, tag = 'output window, operand 0']
    %6 = vsyncpa [#allocation4], 0
    %7 = vsyncpa [#allocation5], 0
    %s8 = scalar_lea.sflag [#allocation5], 1
    %9 = vsyncpa %s8, 0
    loop: start=0, step=1, limit=6
    $region2: #{tpu_custom_call.1} parent=1 // loop_pre_header
      _
    $region3: #{tpu_custom_call.1} parent=1 // loop_header
      %s11 = sphi 0, %s15
      %p12 = scmp.ge.s32.totalorder %s11, 6
      %s18 = sphi 0, %s30
      %s19 = sphi 0, %s26
      %s20 = sphi 0, %s18
      %s21 = sphi 0, %s19
      %s22 = sphi 0, %s20
      %s23 = sphi 0, %s21
      %s31 = sphi 0, %s31
      %s33 = sphi 0, %s31
      %s34 = sphi 0, %s33
      %s48 = sphi 0, %s34
      %s56 = sphi 0, %s58
      %s59 = sphi 0, %s56
      %s60 = sphi 0, %s59
      %s76 = sphi 0, %s60
    $region4: #{tpu_custom_call.1} parent=1 // loop_header_branch
      %14 = sbr.rel (%p12) target = $region8
    $region5: #{tpu_custom_call.1} parent=1 // loop_body
      %s16 = ssub.s32 %s11, 1
      %s17 = ssub.s32 %s11, 2
      %s24 = sadd.s32 1, %s19
      %p25 = scmp.ge.s32.totalorder %s24, 2
      %s26 = scalar_select %p25, 0, %s24
      %s27 = sadd.s32 1, %s18
      %s28 = scalar_select %p25, %s27, %s18
      %p29 = scmp.ge.s32.totalorder %s28, 2
      %s30 = scalar_select %p29, 0, %s28
      %s32 = sadd.s32 %s31, 1
      %p35 = scmp.eq.s32.totalorder %s11, 3
      %p36 = scmp.ne.s32.totalorder %s31, %s33
      %p37 = scmp.eq.s32.totalorder %s11, 0
      %p38 = por %p36, %p37
      %p39 = scmp.ne.s32.totalorder %s31, %s33
      %p40 = scmp.eq.s32.totalorder %s16, 3
      %p41 = por %p39, %p40
      %p42 = scmp.ne.s32.totalorder %s33, %s34
      %p43 = scmp.eq.s32.totalorder %s16, 0
      %p44 = por %p42, %p43
      %p45 = scmp.ne.s32.totalorder %s33, %s34
      %p46 = scmp.eq.s32.totalorder %s17, 3
      %p47 = por %p45, %p46
      %p49 = scmp.ne.s32.totalorder %s34, %s48
      %p50 = scmp.eq.s32.totalorder %s17, 0
      %p51 = por %p49, %p50
      %s52 = ssub.s32 %s19, %s26
      %s53 = ssub.s32 %s18, %s30
      %s54 = sor.u32 %s52, %s53
      %p55 = scmp.eq.s32.totalorder %s54, 0
      %s57 = sadd.s32 %s56, 1
      %s58 = scalar_select %p55, %s56, %s57
      %p61 = pneg %p55
      %p62 = scmp.eq.s32.totalorder %s11, 3
      %p63 = por %p61, %p62
      %p64 = scmp.ne.s32.totalorder %s56, %s59
      %p65 = scmp.eq.s32.totalorder %s11, 0
      %p66 = por %p64, %p65
      %p67 = scmp.ne.s32.totalorder %s56, %s59
      %p68 = scmp.eq.s32.totalorder %s16, 3
      %p69 = por %p67, %p68
      %p70 = scmp.ne.s32.totalorder %s59, %s60
      %p71 = scmp.eq.s32.totalorder %s16, 0
      %p72 = por %p70, %p71
      %p73 = scmp.ne.s32.totalorder %s59, %s60
      %p74 = scmp.eq.s32.totalorder %s17, 3
      %p75 = por %p73, %p74
      %p77 = scmp.ne.s32.totalorder %s60, %s76
      %p78 = scmp.eq.s32.totalorder %s17, 0
      %p79 = por %p77, %p78
      %p80 = scmp.le.s32.totalorder 1, %s11
      %p81 = scmp.lt.s32.totalorder %s11, 5
      %p82 = pnand %p80, %p81
      %p83 = pneg %p82
      // Predicated region
      $region9: #{tpu_custom_call.1} parent=5 // pred_check
        _
      $region10: #{tpu_custom_call.1} parent=5 // pred_check_branch
        %85 = sbr.rel (%p82) target = $region12
      $region11: #{tpu_custom_call.1} parent=5 // pred_region
        %s86 = ssub.s32 %s11, 1
        // Predicated region
        $region13: #{tpu_custom_call.1} parent=11 // pred_check
          %p87 = pneg %p44
        $region14: #{tpu_custom_call.1} parent=11 // pred_check_branch
          %89 = sbr.rel (%p87) target = $region16
        $region15: #{tpu_custom_call.1} parent=11 // pred_region
          %s91 = ssub.s32 128, 128
          %92 = vsyncadd [#allocation4], %s91
          %s94 = sshll.u32 [#allocation3], 4
          %s95 = int_to_ptr.vmem [resolvable:$true] %s94
          %97 = dma.hbm_to_vmem [thread:$0]  %s0, 128, %s95, [#allocation4]
        $region16: #{tpu_custom_call.1} parent=11 // pred_fallthru
          _
      $region12: #{tpu_custom_call.1} parent=5 // pred_fallthru
        _
      %p98 = scmp.lt.s32.totalorder %s11, 4
      // Predicated region
      $region17: #{tpu_custom_call.1} parent=5 // pred_check
        %p99 = pneg %p98
      $region18: #{tpu_custom_call.1} parent=5 // pred_check_branch
        %101 = sbr.rel (%p99) target = $region20
      $region19: #{tpu_custom_call.1} parent=5 // pred_region
        _
      $region20: #{tpu_custom_call.1} parent=5 // pred_fallthru
        _
      %p102 = scmp.le.s32.totalorder 1, %s11
      %p103 = scmp.lt.s32.totalorder %s11, 5
      %p104 = pnand %p102, %p103
      %p105 = pneg %p104
      // Predicated region
      $region21: #{tpu_custom_call.1} parent=5 // pred_check
        _
      $region22: #{tpu_custom_call.1} parent=5 // pred_check_branch
        %107 = sbr.rel (%p104) target = $region24
      $region23: #{tpu_custom_call.1} parent=5 // pred_region
        %s108 = ssub.s32 %s11, 1
        // Predicated region
        $region25: #{tpu_custom_call.1} parent=23 // pred_check
          %p109 = pneg %p44
        $region26: #{tpu_custom_call.1} parent=23 // pred_check_branch
          %111 = sbr.rel (%p109) target = $region28
        $region27: #{tpu_custom_call.1} parent=23 // pred_region
          %112 = dma.done [#allocation4], 128
        $region28: #{tpu_custom_call.1} parent=23 // pred_fallthru
          _
        %p113 = pneg %p44
        %p114 = pneg %p41
        %p115 = pneg %p72
        %p116 = pneg %p69
        %s117 = sand.u32 %s59, 1
        %s118 = scalar_lea.sflag [#allocation5], %s117
        %s119 = sand.u32 %s59, 1
        %s120 = smul.addr %s119, 32
        %s121 = scalar_lea.vmem [#allocation6], %s120
        %s122 = smul.u32 %s20, 8
        %v123 = vld [vmem:[#allocation3] sm:$0xff]
        %p124 = scmp.eq.s32.totalorder %s21, 0
        // Predicated region
        $region29: #{tpu_custom_call.1} parent=23 // pred_check
          %p125 = pneg %p124
        $region30: #{tpu_custom_call.1} parent=23 // pred_check_branch
          %127 = sbr.rel (%p125) target = $region32
        $region31: #{tpu_custom_call.1} parent=23 // pred_region
          %v128 = vlaneseq
          %v129 = vshrl.u32 %v128, 7
          %v130 = vstv %s122
          %v131 = vadd.s32 %v129, %v130
          %v132 = vcvt.s32.f32 %v131
          %v134 = vlaneseq
          %v135 = vshrl.u32 %v134, 7
          %v136 = vsub.s32 0, %v135
          %v137 = vrot.slane %v123, %v136
          %v138 = vlaneseq
          %v139 = vshrl.u32 %v138, 7
          %v140 = vsub.s32 2, %v139
          %v141 = vrot.slane %v123, %v140
          %v142 = vlaneseq
          %v143 = vshrl.u32 %v142, 7
          %v144 = vsub.s32 4, %v143
          %v145 = vrot.slane %v123, %v144
          %v146 = vlaneseq
          %v147 = vshrl.u32 %v146, 7
          %v148 = vsub.s32 6, %v147
          %v149 = vrot.slane %v123, %v148
          %v154 = vlaneseq
          %v155 = vshrl.u32 %v154, 7
          %v156 = vsub.s32 0, %v155
          %v157 = vrot.slane %v137, %v156
          %v158 = vlaneseq
          %v159 = vshrl.u32 %v158, 7
          %v160 = vsub.s32 0, %v159
          %v161 = vrot.slane %v141, %v160
          %v162 = vlaneseq
          %v163 = vshrl.u32 %v162, 7
          %v164 = vsub.s32 0, %v163
          %v165 = vrot.slane %v145, %v164
          %v166 = vlaneseq
          %v167 = vshrl.u32 %v166, 7
          %v168 = vsub.s32 0, %v167
          %v169 = vrot.slane %v149, %v168
          %v170 = vmul.f32 %v132, %v157
          %v171 = vmul.f32 %v132, %v161
          %v172 = vmul.f32 %v132, %v165
          %v173 = vmul.f32 %v132, %v169
          %v174 = vlaneseq
          %v175 = vshrl.u32 %v174, 7
          %v176 = vsub.s32 1, %v175
          %v177 = vrot.slane %v123, %v176
          %v178 = vlaneseq
          %v179 = vshrl.u32 %v178, 7
          %v180 = vsub.s32 3, %v179
          %v181 = vrot.slane %v123, %v180
          %v182 = vlaneseq
          %v183 = vshrl.u32 %v182, 7
          %v184 = vsub.s32 5, %v183
          %v185 = vrot.slane %v123, %v184
          %v186 = vlaneseq
          %v187 = vshrl.u32 %v186, 7
          %v188 = vsub.s32 7, %v187
          %v189 = vrot.slane %v123, %v188
          %v194 = vlaneseq
          %v195 = vshrl.u32 %v194, 7
          %v196 = vsub.s32 1, %v195
          %v197 = vrot.slane %v177, %v196
          %v198 = vlaneseq
          %v199 = vshrl.u32 %v198, 7
          %v200 = vsub.s32 1, %v199
          %v201 = vrot.slane %v181, %v200
          %v202 = vlaneseq
          %v203 = vshrl.u32 %v202, 7
          %v204 = vsub.s32 1, %v203
          %v205 = vrot.slane %v185, %v204
          %v206 = vlaneseq
          %v207 = vshrl.u32 %v206, 7
          %v208 = vsub.s32 1, %v207
          %v209 = vrot.slane %v189, %v208
          %v210 = vadd.f32 %v170, %v197
          %v211 = vadd.f32 %v171, %v201
          %v212 = vadd.f32 %v172, %v205
          %v213 = vadd.f32 %v173, %v209
          %v214 = vand.u32 2147483647, %v210
          %vm215 = vcmp.le.f32.partialorder %v214, 0.7853982
          %vm216 = vcmp.lt.s32.totalorder %v210, 0
          %v217 = vand.u32 %v210, 2139095040
          %v218 = vshrl.u32 %v217, 23
          %v219 = vsub.s32 %v218, 127
          %v220 = vand.u32 2147483647, %v210
          %v221 = vand.u32 %v220, 8388607
          %v222 = vor.u32 %v221, 8388608
          %v223 = vsub.s32 0, %v222
          %v224 = vadd.s32 %v219, 1
          %vm225 = vcmp.gt.s32.totalorder %v224, 0
          %v226 = vsel %vm225, %v224, 0
          %v227 = vshrl.u32 %v226, 5
          %v228 = vand.u32 %v226, 31
          %v229 = vsub.s32 32, %v228
          %v230 = vshrl.u32 683565275, %v229
          %v231 = vshll.u32 683565275, %v228
          %v232 = vshrl.u32 2475754826, %v229
          %v233 = vor.u32 %v231, %v232
          %v234 = vshll.u32 2475754826, %v228
          %v235 = vshrl.u32 2131351028, %v229
          %v236 = vor.u32 %v234, %v235
          %v237 = vshll.u32 2131351028, %v228
          %v238 = vshrl.u32 2102212464, %v229
          %v239 = vor.u32 %v237, %v238
          %v240 = vshll.u32 2102212464, %v228
          %v241 = vshrl.u32 920167782, %v229
          %v242 = vor.u32 %v240, %v241
          %v243 = vshll.u32 920167782, %v228
          %v244 = vshrl.u32 1326507024, %v229
          %v245 = vor.u32 %v243, %v244
          %vm246 = vcmp.lt.s32.totalorder %v227, 1
          %vm247 = vcmp.lt.s32.totalorder %v227, 2
          %vm248 = vcmp.lt.s32.totalorder %v227, 3
          %vm249 = vcmp.lt.s32.totalorder %v227, 4
          %v250 = vsel %vm246, %v230, %v233
          %v251 = vsel %vm249, %v239, 2102212464
          %v252 = vsel %vm248, %v236, %v251
          %v253 = vsel %vm247, %v250, %v252
          %v254 = vsel %vm246, %v233, %v236
          %v255 = vsel %vm249, %v242, 920167782
          %v256 = vsel %vm248, %v239, %v255
          %v257 = vsel %vm247, %v254, %v256
          %v258 = vsel %vm246, %v236, %v239
          %v259 = vsel %vm249, %v245, 1326507024
          %v260 = vsel %vm248, %v242, %v259
          %v261 = vsel %vm247, %v258, %v260
          %v262 = vshll.u32 %v222, 8
          %v263 = vmul.u32.u64.compose %v262, %v261
          %v264 = vextract.low.u32 %v263
          %v265 = vextract.high.u32 %v263
          %v266 = vmul.u32.u64.compose %v262, %v257
          %v267 = vextract.low.u32 %v266
          %v268 = vextract.high.u32 %v266
          %v269 = vmul.u32 %v262, %v253
          %v270 = vadd.s32 %v265, %v267
          %vm271 = vc.u32 %v265, %v267
          %v272 = vadd.s32 %v268, 1
          %v273 = vsel %vm271, %v272, %v268
          %v274 = vadd.s32 %v269, %v273
          %v275 = vadd.s32 %v274, 536870912
          %v276 = vshrl.u32 %v275, 30
          %v277 = vshll.u32 %v276, 30
          %v278 = vsub.s32 %v274, %v277
          %vm279 = vcmp.lt.s32.totalorder %v278, 0
          %v280 = vsub.s32 0, %v278
          %v281 = vsel %vm279, %v280, %v278
          %v282 = vclz %v281
          %v283 = vsub.s32 %v282, 2
          %vm284 = vcmp.gt.s32.totalorder 0, %v283
          %v285 = vsel %vm284, 0, %v283
          %v286 = vsub.s32 32, %v285
          %v287 = vshll.u32 %v278, %v285
          %v288 = vshrl.u32 %v270, %v286
          %v289 = vor.u32 %v287, %v288
          %v290 = vsub.s32 4294967266, %v285
          %v291 = vadd.s32 %v290, 127
          %v292 = vshll.u32 %v291, 23
          %v293 = vor.u32 4788187, %v292
          %v294 = vand.u32 2147483647, %v293
          %v296 = vcvt.s32.f32 %v289
          %v297 = vmul.f32 %v296, %v294
          %v298 = vxor.u32 %v297, 2147483648
          %v299 = vsel %vm216, %v298, %v297
          %v300 = vsub.s32 4, %v276
          %v301 = vsel %vm216, %v300, %v276
          %v302 = vsel %vm215, %v210, %v299
          %v303 = vsel %vm215, 0, %v301
          %v304 = vcosq.f32.pop %v302
          %v305 = vsinq.f32.pop %v302
          %vm306 = vweird.f32 %v210
          %v307 = vadd.s32 %v303, 3
          %v308 = vand.u32 %v307, 3
          %vm309 = vcmp.lt.s32.totalorder %v308, 2
          %vm310 = vcmp.eq.s32.totalorder %v308, 0
          %v311 = vxor.u32 %v305, 2147483648
          %v312 = vsel %vm310, %v304, %v311
          %vm313 = vcmp.eq.s32.totalorder %v308, 2
          %v314 = vxor.u32 %v304, 2147483648
          %v315 = vsel %vm313, %v314, %v305
          %v316 = vsel %vm309, %v312, %v315
          %v317 = vsel %vm306, nan, %v316
          %v318 = vand.u32 2147483647, %v211
          %vm319 = vcmp.le.f32.partialorder %v318, 0.7853982
          %vm320 = vcmp.lt.s32.totalorder %v211, 0
          %v321 = vand.u32 %v211, 2139095040
          %v322 = vshrl.u32 %v321, 23
          %v323 = vsub.s32 %v322, 127
          %v324 = vand.u32 2147483647, %v211
          %v325 = vand.u32 %v324, 8388607
          %v326 = vor.u32 %v325, 8388608
          %v327 = vsub.s32 0, %v326
          %v328 = vadd.s32 %v323, 1
          %vm329 = vcmp.gt.s32.totalorder %v328, 0
          %v330 = vsel %vm329, %v328, 0
          %v331 = vshrl.u32 %v330, 5
          %v332 = vand.u32 %v330, 31
          %v333 = vsub.s32 32, %v332
          %v334 = vshrl.u32 683565275, %v333
          %v335 = vshll.u32 683565275, %v332
          %v336 = vshrl.u32 2475754826, %v333
          %v337 = vor.u32 %v335, %v336
          %v338 = vshll.u32 2475754826, %v332
          %v339 = vshrl.u32 2131351028, %v333
          %v340 = vor.u32 %v338, %v339
          %v341 = vshll.u32 2131351028, %v332
          %v342 = vshrl.u32 2102212464, %v333
          %v343 = vor.u32 %v341, %v342
          %v344 = vshll.u32 2102212464, %v332
          %v345 = vshrl.u32 920167782, %v333
          %v346 = vor.u32 %v344, %v345
          %v347 = vshll.u32 920167782, %v332
          %v348 = vshrl.u32 1326507024, %v333
          %v349 = vor.u32 %v347, %v348
          %vm350 = vcmp.lt.s32.totalorder %v331, 1
          %vm351 = vcmp.lt.s32.totalorder %v331, 2
          %vm352 = vcmp.lt.s32.totalorder %v331, 3
          %vm353 = vcmp.lt.s32.totalorder %v331, 4
          %v354 = vsel %vm350, %v334, %v337
          %v355 = vsel %vm353, %v343, 2102212464
          %v356 = vsel %vm352, %v340, %v355
          %v357 = vsel %vm351, %v354, %v356
          %v358 = vsel %vm350, %v337, %v340
          %v359 = vsel %vm353, %v346, 920167782
          %v360 = vsel %vm352, %v343, %v359
          %v361 = vsel %vm351, %v358, %v360
          %v362 = vsel %vm350, %v340, %v343
          %v363 = vsel %vm353, %v349, 1326507024
          %v364 = vsel %vm352, %v346, %v363
          %v365 = vsel %vm351, %v362, %v364
          %v366 = vshll.u32 %v326, 8
          %v367 = vmul.u32.u64.compose %v366, %v365
          %v368 = vextract.low.u32 %v367
          %v369 = vextract.high.u32 %v367
          %v370 = vmul.u32.u64.compose %v366, %v361
          %v371 = vextract.low.u32 %v370
          %v372 = vextract.high.u32 %v370
          %v373 = vmul.u32 %v366, %v357
          %v374 = vadd.s32 %v369, %v371
          %vm375 = vc.u32 %v369, %v371
          %v376 = vadd.s32 %v372, 1
          %v377 = vsel %vm375, %v376, %v372
          %v378 = vadd.s32 %v373, %v377
          %v379 = vadd.s32 %v378, 536870912
          %v380 = vshrl.u32 %v379, 30
          %v381 = vshll.u32 %v380, 30
          %v382 = vsub.s32 %v378, %v381
          %vm383 = vcmp.lt.s32.totalorder %v382, 0
          %v384 = vsub.s32 0, %v382
          %v385 = vsel %vm383, %v384, %v382
          %v386 = vclz %v385
          %v387 = vsub.s32 %v386, 2
          %vm388 = vcmp.gt.s32.totalorder 0, %v387
          %v389 = vsel %vm388, 0, %v387
          %v390 = vsub.s32 32, %v389
          %v391 = vshll.u32 %v382, %v389
          %v392 = vshrl.u32 %v374, %v390
          %v393 = vor.u32 %v391, %v392
          %v394 = vsub.s32 4294967266, %v389
          %v395 = vadd.s32 %v394, 127
          %v396 = vshll.u32 %v395, 23
          %v397 = vor.u32 4788187, %v396
          %v398 = vand.u32 2147483647, %v397
          %v400 = vcvt.s32.f32 %v393
          %v401 = vmul.f32 %v400, %v398
          %v402 = vxor.u32 %v401, 2147483648
          %v403 = vsel %vm320, %v402, %v401
          %v404 = vsub.s32 4, %v380
          %v405 = vsel %vm320, %v404, %v380
          %v406 = vsel %vm319, %v211, %v403
          %v407 = vsel %vm319, 0, %v405
          %v408 = vcosq.f32.pop %v406
          %v409 = vsinq.f32.pop %v406
          %vm410 = vweird.f32 %v211
          %v411 = vadd.s32 %v407, 3
          %v412 = vand.u32 %v411, 3
          %vm413 = vcmp.lt.s32.totalorder %v412, 2
          %vm414 = vcmp.eq.s32.totalorder %v412, 0
          %v415 = vxor.u32 %v409, 2147483648
          %v416 = vsel %vm414, %v408, %v415
          %vm417 = vcmp.eq.s32.totalorder %v412, 2
          %v418 = vxor.u32 %v408, 2147483648
          %v419 = vsel %vm417, %v418, %v409
          %v420 = vsel %vm413, %v416, %v419
          %v421 = vsel %vm410, nan, %v420
          %v422 = vand.u32 2147483647, %v212
          %vm423 = vcmp.le.f32.partialorder %v422, 0.7853982
          %vm424 = vcmp.lt.s32.totalorder %v212, 0
          %v425 = vand.u32 %v212, 2139095040
          %v426 = vshrl.u32 %v425, 23
          %v427 = vsub.s32 %v426, 127
          %v428 = vand.u32 2147483647, %v212
          %v429 = vand.u32 %v428, 8388607
          %v430 = vor.u32 %v429, 8388608
          %v431 = vsub.s32 0, %v430
          %v432 = vadd.s32 %v427, 1
          %vm433 = vcmp.gt.s32.totalorder %v432, 0
          %v434 = vsel %vm433, %v432, 0
          %v435 = vshrl.u32 %v434, 5
          %v436 = vand.u32 %v434, 31
          %v437 = vsub.s32 32, %v436
          %v438 = vshrl.u32 683565275, %v437
          %v439 = vshll.u32 683565275, %v436
          %v440 = vshrl.u32 2475754826, %v437
          %v441 = vor.u32 %v439, %v440
          %v442 = vshll.u32 2475754826, %v436
          %v443 = vshrl.u32 2131351028, %v437
          %v444 = vor.u32 %v442, %v443
          %v445 = vshll.u32 2131351028, %v436
          %v446 = vshrl.u32 2102212464, %v437
          %v447 = vor.u32 %v445, %v446
          %v448 = vshll.u32 2102212464, %v436
          %v449 = vshrl.u32 920167782, %v437
          %v450 = vor.u32 %v448, %v449
          %v451 = vshll.u32 920167782, %v436
          %v452 = vshrl.u32 1326507024, %v437
          %v453 = vor.u32 %v451, %v452
          %vm454 = vcmp.lt.s32.totalorder %v435, 1
          %vm455 = vcmp.lt.s32.totalorder %v435, 2
          %vm456 = vcmp.lt.s32.totalorder %v435, 3
          %vm457 = vcmp.lt.s32.totalorder %v435, 4
          %v458 = vsel %vm454, %v438, %v441
          %v459 = vsel %vm457, %v447, 2102212464
          %v460 = vsel %vm456, %v444, %v459
          %v461 = vsel %vm455, %v458, %v460
          %v462 = vsel %vm454, %v441, %v444
          %v463 = vsel %vm457, %v450, 920167782
          %v464 = vsel %vm456, %v447, %v463
          %v465 = vsel %vm455, %v462, %v464
          %v466 = vsel %vm454, %v444, %v447
          %v467 = vsel %vm457, %v453, 1326507024
          %v468 = vsel %vm456, %v450, %v467
          %v469 = vsel %vm455, %v466, %v468
          %v470 = vshll.u32 %v430, 8
          %v471 = vmul.u32.u64.compose %v470, %v469
          %v472 = vextract.low.u32 %v471
          %v473 = vextract.high.u32 %v471
          %v474 = vmul.u32.u64.compose %v470, %v465
          %v475 = vextract.low.u32 %v474
          %v476 = vextract.high.u32 %v474
          %v477 = vmul.u32 %v470, %v461
          %v478 = vadd.s32 %v473, %v475
          %vm479 = vc.u32 %v473, %v475
          %v480 = vadd.s32 %v476, 1
          %v481 = vsel %vm479, %v480, %v476
          %v482 = vadd.s32 %v477, %v481
          %v483 = vadd.s32 %v482, 536870912
          %v484 = vshrl.u32 %v483, 30
          %v485 = vshll.u32 %v484, 30
          %v486 = vsub.s32 %v482, %v485
          %vm487 = vcmp.lt.s32.totalorder %v486, 0
          %v488 = vsub.s32 0, %v486
          %v489 = vsel %vm487, %v488, %v486
          %v490 = vclz %v489
          %v491 = vsub.s32 %v490, 2
          %vm492 = vcmp.gt.s32.totalorder 0, %v491
          %v493 = vsel %vm492, 0, %v491
          %v494 = vsub.s32 32, %v493
          %v495 = vshll.u32 %v486, %v493
          %v496 = vshrl.u32 %v478, %v494
          %v497 = vor.u32 %v495, %v496
          %v498 = vsub.s32 4294967266, %v493
          %v499 = vadd.s32 %v498, 127
          %v500 = vshll.u32 %v499, 23
          %v501 = vor.u32 4788187, %v500
          %v502 = vand.u32 2147483647, %v501
          %v504 = vcvt.s32.f32 %v497
          %v505 = vmul.f32 %v504, %v502
          %v506 = vxor.u32 %v505, 2147483648
          %v507 = vsel %vm424, %v506, %v505
          %v508 = vsub.s32 4, %v484
          %v509 = vsel %vm424, %v508, %v484
          %v510 = vsel %vm423, %v212, %v507
          %v511 = vsel %vm423, 0, %v509
          %v512 = vcosq.f32.pop %v510
          %v513 = vsinq.f32.pop %v510
          %vm514 = vweird.f32 %v212
          %v515 = vadd.s32 %v511, 3
          %v516 = vand.u32 %v515, 3
          %vm517 = vcmp.lt.s32.totalorder %v516, 2
          %vm518 = vcmp.eq.s32.totalorder %v516, 0
          %v519 = vxor.u32 %v513, 2147483648
          %v520 = vsel %vm518, %v512, %v519
          %vm521 = vcmp.eq.s32.totalorder %v516, 2
          %v522 = vxor.u32 %v512, 2147483648
          %v523 = vsel %vm521, %v522, %v513
          %v524 = vsel %vm517, %v520, %v523
          %v525 = vsel %vm514, nan, %v524
          %v526 = vand.u32 2147483647, %v213
          %vm527 = vcmp.le.f32.partialorder %v526, 0.7853982
          %vm528 = vcmp.lt.s32.totalorder %v213, 0
          %v529 = vand.u32 %v213, 2139095040
          %v530 = vshrl.u32 %v529, 23
          %v531 = vsub.s32 %v530, 127
          %v532 = vand.u32 2147483647, %v213
          %v533 = vand.u32 %v532, 8388607
          %v534 = vor.u32 %v533, 8388608
          %v535 = vsub.s32 0, %v534
          %v536 = vadd.s32 %v531, 1
          %vm537 = vcmp.gt.s32.totalorder %v536, 0
          %v538 = vsel %vm537, %v536, 0
          %v539 = vshrl.u32 %v538, 5
          %v540 = vand.u32 %v538, 31
          %v541 = vsub.s32 32, %v540
          %v542 = vshrl.u32 683565275, %v541
          %v543 = vshll.u32 683565275, %v540
          %v544 = vshrl.u32 2475754826, %v541
          %v545 = vor.u32 %v543, %v544
          %v546 = vshll.u32 2475754826, %v540
          %v547 = vshrl.u32 2131351028, %v541
          %v548 = vor.u32 %v546, %v547
          %v549 = vshll.u32 2131351028, %v540
          %v550 = vshrl.u32 2102212464, %v541
          %v551 = vor.u32 %v549, %v550
          %v552 = vshll.u32 2102212464, %v540
          %v553 = vshrl.u32 920167782, %v541
          %v554 = vor.u32 %v552, %v553
          %v555 = vshll.u32 920167782, %v540
          %v556 = vshrl.u32 1326507024, %v541
          %v557 = vor.u32 %v555, %v556
          %vm558 = vcmp.lt.s32.totalorder %v539, 1
          %vm559 = vcmp.lt.s32.totalorder %v539, 2
          %vm560 = vcmp.lt.s32.totalorder %v539, 3
          %vm561 = vcmp.lt.s32.totalorder %v539, 4
          %v562 = vsel %vm558, %v542, %v545
          %v563 = vsel %vm561, %v551, 2102212464
          %v564 = vsel %vm560, %v548, %v563
          %v565 = vsel %vm559, %v562, %v564
          %v566 = vsel %vm558, %v545, %v548
          %v567 = vsel %vm561, %v554, 920167782
          %v568 = vsel %vm560, %v551, %v567
          %v569 = vsel %vm559, %v566, %v568
          %v570 = vsel %vm558, %v548, %v551
          %v571 = vsel %vm561, %v557, 1326507024
          %v572 = vsel %vm560, %v554, %v571
          %v573 = vsel %vm559, %v570, %v572
          %v574 = vshll.u32 %v534, 8
          %v575 = vmul.u32.u64.compose %v574, %v573
          %v576 = vextract.low.u32 %v575
          %v577 = vextract.high.u32 %v575
          %v578 = vmul.u32.u64.compose %v574, %v569
          %v579 = vextract.low.u32 %v578
          %v580 = vextract.high.u32 %v578
          %v581 = vmul.u32 %v574, %v565
          %v582 = vadd.s32 %v577, %v579
          %vm583 = vc.u32 %v577, %v579
          %v584 = vadd.s32 %v580, 1
          %v585 = vsel %vm583, %v584, %v580
          %v586 = vadd.s32 %v581, %v585
          %v587 = vadd.s32 %v586, 536870912
          %v588 = vshrl.u32 %v587, 30
          %v589 = vshll.u32 %v588, 30
          %v590 = vsub.s32 %v586, %v589
          %vm591 = vcmp.lt.s32.totalorder %v590, 0
          %v592 = vsub.s32 0, %v590
          %v593 = vsel %vm591, %v592, %v590
          %v594 = vclz %v593
          %v595 = vsub.s32 %v594, 2
          %vm596 = vcmp.gt.s32.totalorder 0, %v595
          %v597 = vsel %vm596, 0, %v595
          %v598 = vsub.s32 32, %v597
          %v599 = vshll.u32 %v590, %v597
          %v600 = vshrl.u32 %v582, %v598
          %v601 = vor.u32 %v599, %v600
          %v602 = vsub.s32 4294967266, %v597
          %v603 = vadd.s32 %v602, 127
          %v604 = vshll.u32 %v603, 23
          %v605 = vor.u32 4788187, %v604
          %v606 = vand.u32 2147483647, %v605
          %v608 = vcvt.s32.f32 %v601
          %v609 = vmul.f32 %v608, %v606
          %v610 = vxor.u32 %v609, 2147483648
          %v611 = vsel %vm528, %v610, %v609
          %v612 = vsub.s32 4, %v588
          %v613 = vsel %vm528, %v612, %v588
          %v614 = vsel %vm527, %v213, %v611
          %v615 = vsel %vm527, 0, %v613
          %v616 = vcosq.f32.pop %v614
          %v617 = vsinq.f32.pop %v614
          %vm618 = vweird.f32 %v213
          %v619 = vadd.s32 %v615, 3
          %v620 = vand.u32 %v619, 3
          %vm621 = vcmp.lt.s32.totalorder %v620, 2
          %vm622 = vcmp.eq.s32.totalorder %v620, 0
          %v623 = vxor.u32 %v617, 2147483648
          %v624 = vsel %vm622, %v616, %v623
          %vm625 = vcmp.eq.s32.totalorder %v620, 2
          %v626 = vxor.u32 %v616, 2147483648
          %v627 = vsel %vm625, %v626, %v617
          %v628 = vsel %vm621, %v624, %v627
          %v629 = vsel %vm618, nan, %v628
          %630 = vst [vmem:[#allocation2] sm:$0xff] %v317
          %631 = vst [vmem:[#allocation2 + $0x8] sm:$0xff] %v421
          %632 = vst [vmem:[#allocation2 + $0x10] sm:$0xff] %v525
          %633 = vst [vmem:[#allocation2 + $0x18] sm:$0xff] %v629
        $region32: #{tpu_custom_call.1} parent=23 // pred_fallthru
          _
        %v634 = vld [vmem:[#allocation2] sm:$0xff]
        %v635 = vld [vmem:[#allocation2 + $0x8] sm:$0xff]
        %v636 = vld [vmem:[#allocation2 + $0x10] sm:$0xff]
        %v637 = vld [vmem:[#allocation2 + $0x18] sm:$0xff]
        %638 = vst [vmem:[%s121] sm:$0xff] %v634
        %639 = vst [vmem:[%s121 + $0x8] sm:$0xff] %v635
        %640 = vst [vmem:[%s121 + $0x10] sm:$0xff] %v636
        %641 = vst [vmem:[%s121 + $0x18] sm:$0xff] %v637
        %s642 = sand.u32 %s59, 1
        %s643 = scalar_lea.sflag [#allocation5], %s642
        %s644 = sand.u32 %s59, 1
        %s645 = smul.addr %s644, 32
        %s646 = scalar_lea.vmem [#allocation6], %s645
        // Predicated region
        $region33: #{tpu_custom_call.1} parent=23 // pred_check
          %p647 = pneg %p69
        $region34: #{tpu_custom_call.1} parent=23 // pred_check_branch
          %649 = sbr.rel (%p647) target = $region36
        $region35: #{tpu_custom_call.1} parent=23 // pred_region
          %s651 = ssub.s32 512, 512
          %652 = vsyncadd %s643, %s651
          %s653 = smul.addr %s20, 4
          %s654 = smul.addr %s21, 8
          %s655 = sadd.s32 %s653, %s654
          %s656 = smul.addr %s655, 128
          %s657 = scalar_lea.hbm %s1, %s656
          %s659 = sshll.u32 %s646, 4
          %s660 = int_to_ptr.vmem [resolvable:$true] %s659
          %662 = dma.vmem_to_hbm [thread:$0]  %s660, 512, %s657, %s643
        $region36: #{tpu_custom_call.1} parent=23 // pred_fallthru
          _
      $region24: #{tpu_custom_call.1} parent=5 // pred_fallthru
        _
      %p663 = scmp.le.s32.totalorder 2, %s11
      // Predicated region
      $region37: #{tpu_custom_call.1} parent=5 // pred_check
        %p664 = pneg %p663
      $region38: #{tpu_custom_call.1} parent=5 // pred_check_branch
        %666 = sbr.rel (%p664) target = $region40
      $region39: #{tpu_custom_call.1} parent=5 // pred_region
        %s667 = ssub.s32 %s11, 2
        // Predicated region
        $region41: #{tpu_custom_call.1} parent=39 // pred_check
          %p668 = pneg %p75
        $region42: #{tpu_custom_call.1} parent=39 // pred_check_branch
          %670 = sbr.rel (%p668) target = $region44
        $region43: #{tpu_custom_call.1} parent=39 // pred_region
          %s671 = sand.u32 %s60, 1
          %s672 = scalar_lea.sflag [#allocation5], %s671
          %s673 = sand.u32 %s60, 1
          %s674 = smul.addr %s673, 32
          %s675 = scalar_lea.vmem [#allocation6], %s674
          %676 = dma.done %s672, 512
        $region44: #{tpu_custom_call.1} parent=39 // pred_fallthru
          _
      $region40: #{tpu_custom_call.1} parent=5 // pred_fallthru
        _
    $region6: #{tpu_custom_call.1} parent=1 // loop_footer
      %s15 = sadd.s32 1, %s11
    $region7: #{tpu_custom_call.1} parent=1 // loop_footer_branch
      %10 = sbr.rel target = $region3
    $region8: #{tpu_custom_call.1} parent=1 // loop_exit
      _
    %677 = vsyncpa [#allocation4], 1
    %s678 = scalar_lea.sflag [#allocation4], 1
    %679 = vsyncpa %s678, 1
    %680 = vsyncpa [#allocation5], 1
    %s681 = scalar_lea.sflag [#allocation5], 1
    %682 = vsyncpa %s681, 1

</llo_original>
